<compile_context>
chip_gen: v7x
topology: tpu7x:2x2x1
jax: 0.10.0
libtpu: 0.0.40
codegen_flags: <defaults>
</compile_context>

<pallas_src>
import functools

import jax
import jax.numpy as jnp
from jax.experimental import pallas as pl
from jax.experimental.pallas import tpu as pltpu

EPS = 1e-20


def _probnet_kernel(p_ref, u_ref, w1_ref, b1_ref, w2_ref, b2_ref, out_ref,
                    *, inv_temperature):
    """Fused reparameterization_bernoulli + Linear -> ReLU -> Linear."""
    p = p_ref[...]                                   # (bm, D) probabilities, f32
    u = u_ref[...]                                   # (bm, D) uniforms in [0, 1), f32

    # --- reparameterization_bernoulli (elementwise, f32 on VPU/EUP) ---
    # Two log-of-ratio terms; kept separate so the product never hits eps^2 underflow.
    logit_u = jnp.log((u + EPS) / (1.0 - u + EPS))
    logit_p = jnp.log((p + EPS) / (1.0 - p + EPS))
    x = jax.nn.sigmoid((logit_u + logit_p) * inv_temperature)   # "spikes" ~ Bernoulli(P)

    # --- model.forward(X): Linear(D, HID) -> ReLU -> Linear(HID, OUT) on the MXU ---
    # bf16 operands, f32 accumulation for both dots.
    h = jnp.dot(x.astype(jnp.bfloat16), w1_ref[...],
                preferred_element_type=jnp.float32) + b1_ref[...]
    h = jnp.maximum(h, 0.0)
    out_ref[...] = (jnp.dot(h.astype(jnp.bfloat16), w2_ref[...],
                            preferred_element_type=jnp.float32) + b2_ref[...])


def prepare_params(w1, b1, w2, b2, lane=128):
    """One-time parameter prep (hoisted out of the per-call path).

    w1: (D, HID), b1: (HID,) or (1, HID), w2: (HID, OUT), b2: (OUT,) or (1, OUT)
    (Linear weights are stored (in, out), i.e. transposed vs torch's (out, in).)
    """
    HID = w1.shape[1]
    OUT = w2.shape[1]
    OUTP = -(-OUT // lane) * lane                    # lane-pad OUT -> multiple of 128
    w1_bf = w1.astype(jnp.bfloat16)                  # halves the dominant HBM DMA
    b1_f = b1.reshape(1, HID).astype(jnp.float32)
    w2_pad = jnp.zeros((HID, OUTP), jnp.bfloat16).at[:, :OUT].set(w2.astype(jnp.bfloat16))
    b2_pad = jnp.zeros((1, OUTP), jnp.float32).at[:, :OUT].set(
        b2.reshape(1, OUT).astype(jnp.float32))
    return (w1_bf, b1_f, w2_pad, b2_pad)


def prob_network_continuous_forward(P_nchw, prepared, key, out_features,
                                    temperature=0.01):
    """ProbNetworkContinuous.forward(P) for the synthetic MLP model.

    Returns (out, U) where U are the uniforms used for the reparameterization
    (the torch.rand equivalent), handy for verification.
    """
    w1_bf, b1_f, w2_pad, b2_pad = prepared
    B = P_nchw.shape[0]
    p2 = P_nchw.reshape(B, -1).astype(jnp.float32)   # torch's .view(B, -1), row-major
    D = p2.shape[1]
    HID = w1_bf.shape[1]
    OUTP = w2_pad.shape[1]

    # torch.rand(P.size()) equivalent (drawn outside the kernel; see header note).
    U = jax.random.uniform(key, (B, D), jnp.float32)

    # Batch block: full batch for small B; 256-row blocks at real batch so the first
    # matmul fills the MXU M dimension and v7x's two TensorCores both get work.
    if B > 256 and B % 256 == 0:
        bm = 256
    else:
        bm = B                                       # full-dim block (exempt from 8-row rule)
    grid = (B // bm,)

    kernel = functools.partial(_probnet_kernel, inv_temperature=1.0 / temperature)

    out_pad = pl.pallas_call(
        kernel,
        out_shape=jax.ShapeDtypeStruct((B, OUTP), jnp.float32),
        grid=grid,
        in_specs=[
            pl.BlockSpec((bm, D), lambda i: (i, 0)),        # P block
            pl.BlockSpec((bm, D), lambda i: (i, 0)),        # U block
            pl.BlockSpec((D, HID), lambda i: (0, 0)),       # w1 (VMEM-resident)
            pl.BlockSpec((1, HID), lambda i: (0, 0)),       # b1
            pl.BlockSpec((HID, OUTP), lambda i: (0, 0)),    # w2 (VMEM-resident)
            pl.BlockSpec((1, OUTP), lambda i: (0, 0)),      # b2
        ],
        out_specs=pl.BlockSpec((bm, OUTP), lambda i: (i, 0)),
        compiler_params=pltpu.CompilerParams(
            dimension_semantics=("parallel",)),
    )(p2, U, w1_bf, b1_f, w2_pad, b2_pad)

    return out_pad[:, :out_features], U


if __name__ == "__main__":
    # Small shapes consistent with an NCHW probability map feeding an MLP head.
    B, C, H, W = 2, 4, 16, 16
    D = C * H * W            # 1024
    HID, OUT = 128, 10
    temperature = 0.01

    key = jax.random.PRNGKey(0)
    kP, k1, k2, k3, k4, kU = jax.random.split(key, 6)

    # P: Bernoulli probabilities in [0, 1)
    P = jax.random.uniform(kP, (B, C, H, W), jnp.float32)

    # Deterministic synthetic model parameters.
    w1 = jax.random.normal(k1, (D, HID), jnp.float32) * (1.0 / jnp.sqrt(D))
    b1 = jax.random.normal(k2, (1, HID), jnp.float32) * 0.01
    w2 = jax.random.normal(k3, (HID, OUT), jnp.float32) * (1.0 / jnp.sqrt(HID))
    b2 = jax.random.normal(k4, (1, OUT), jnp.float32) * 0.01

    prepared = prepare_params(w1, b1, w2, b2)        # one-time prep, reused per call
    out, U = prob_network_continuous_forward(P, prepared, kU, out_features=OUT,
                                             temperature=temperature)
    out = jax.block_until_ready(out)

    # Pure-JAX reference of the same forward pass (PyTorch 4-log formulation), fed
    # with the same uniforms and the same precision choices (bf16 ops, f32 accum).
    def reference(P, U):
        p = P.reshape(B, -1)
        logits = (jnp.log(U + EPS) - jnp.log(1.0 - U + EPS)
                  + jnp.log(p + EPS) - jnp.log(1.0 - p + EPS)) / temperature
        x = jax.nn.sigmoid(logits)
        h = jnp.maximum(
            jnp.dot(x.astype(jnp.bfloat16), w1.astype(jnp.bfloat16),
                    preferred_element_type=jnp.float32) + b1, 0.0)
        return jnp.dot(h.astype(jnp.bfloat16), w2.astype(jnp.bfloat16),
                       preferred_element_type=jnp.float32) + b2

    ref = reference(P, U)

    assert out.shape == (B, OUT)
    assert U.shape == (B, D)
    assert bool(jnp.all((U >= 0.0) & (U < 1.0)))
    assert bool(jnp.all(jnp.isfinite(out)))
    assert bool(jnp.allclose(out, ref, atol=2e-2, rtol=2e-2)), (out, ref)
    print("KERNEL_OK")
</pallas_src>

<mosaic_0001>
module attributes {stable_mosaic.version = 11 : i64} {
  func.func @_probnet_kernel(%arg0: i32, %arg1: memref<2x1024xf32, #tpu.memory_space<vmem>>, %arg2: memref<2x1024xf32, #tpu.memory_space<vmem>>, %arg3: memref<1024x128xbf16, #tpu.memory_space<vmem>>, %arg4: memref<1x128xf32, #tpu.memory_space<vmem>>, %arg5: memref<128x128xbf16, #tpu.memory_space<vmem>>, %arg6: memref<1x128xf32, #tpu.memory_space<vmem>>, %arg7: memref<2x128xf32, #tpu.memory_space<vmem>>) attributes {dimension_semantics = [#tpu.dimension_semantics<parallel>], iteration_bounds = array<i64: 1>, scalar_prefetch = 0 : i64, scratch_operands = 0 : i64, tpu.core_type = #tpu.core_type<tc>, window_params = [{transform_indices = @transform_0, window_bounds = array<i64: 2, 1024>}, {transform_indices = @transform_1, window_bounds = array<i64: 2, 1024>}, {pipeline_mode = #tpu.pipeline_mode<synchronous>, transform_indices = @transform_2, window_bounds = array<i64: 1024, 128>}, {pipeline_mode = #tpu.pipeline_mode<synchronous>, transform_indices = @transform_3, window_bounds = array<i64: 1, 128>}, {pipeline_mode = #tpu.pipeline_mode<synchronous>, transform_indices = @transform_4, window_bounds = array<i64: 128, 128>}, {pipeline_mode = #tpu.pipeline_mode<synchronous>, transform_indices = @transform_5, window_bounds = array<i64: 1, 128>}, {transform_indices = @transform_6, window_bounds = array<i64: 2, 128>}]} {
    %c0 = arith.constant 0 : index
    %c0_0 = arith.constant 0 : index
    %0 = vector.load %arg1[%c0, %c0_0] : memref<2x1024xf32, #tpu.memory_space<vmem>>, vector<2x1024xf32>
    %c0_1 = arith.constant 0 : index
    %c0_2 = arith.constant 0 : index
    %1 = vector.load %arg2[%c0_1, %c0_2] : memref<2x1024xf32, #tpu.memory_space<vmem>>, vector<2x1024xf32>
    %cst = arith.constant 9.99999968E-21 : f32
    %2 = vector.broadcast %cst : f32 to vector<2x1024xf32>
    %3 = arith.addf %1, %2 : vector<2x1024xf32>
    %cst_3 = arith.constant 1.000000e+00 : f32
    %4 = vector.broadcast %cst_3 : f32 to vector<2x1024xf32>
    %5 = arith.subf %4, %1 : vector<2x1024xf32>
    %cst_4 = arith.constant 9.99999968E-21 : f32
    %6 = vector.broadcast %cst_4 : f32 to vector<2x1024xf32>
    %7 = arith.addf %5, %6 : vector<2x1024xf32>
    %8 = arith.divf %3, %7 : vector<2x1024xf32>
    %9 = math.log %8 : vector<2x1024xf32>
    %cst_5 = arith.constant 9.99999968E-21 : f32
    %10 = vector.broadcast %cst_5 : f32 to vector<2x1024xf32>
    %11 = arith.addf %0, %10 : vector<2x1024xf32>
    %cst_6 = arith.constant 1.000000e+00 : f32
    %12 = vector.broadcast %cst_6 : f32 to vector<2x1024xf32>
    %13 = arith.subf %12, %0 : vector<2x1024xf32>
    %cst_7 = arith.constant 9.99999968E-21 : f32
    %14 = vector.broadcast %cst_7 : f32 to vector<2x1024xf32>
    %15 = arith.addf %13, %14 : vector<2x1024xf32>
    %16 = arith.divf %11, %15 : vector<2x1024xf32>
    %17 = math.log %16 : vector<2x1024xf32>
    %18 = arith.addf %9, %17 : vector<2x1024xf32>
    %cst_8 = arith.constant 1.000000e+02 : f32
    %19 = vector.broadcast %cst_8 : f32 to vector<2x1024xf32>
    %20 = arith.mulf %18, %19 : vector<2x1024xf32>
    %21 = arith.negf %20 : vector<2x1024xf32>
    %22 = math.exp %21 : vector<2x1024xf32>
    %cst_9 = arith.constant 1.000000e+00 : f32
    %23 = vector.broadcast %cst_9 : f32 to vector<2x1024xf32>
    %24 = arith.addf %23, %22 : vector<2x1024xf32>
    %25 = arith.divf %23, %24 : vector<2x1024xf32>
    %26 = arith.truncf %25 : vector<2x1024xf32> to vector<2x1024xbf16>
    %c0_10 = arith.constant 0 : index
    %c0_11 = arith.constant 0 : index
    %27 = vector.load %arg3[%c0_10, %c0_11] : memref<1024x128xbf16, #tpu.memory_space<vmem>>, vector<1024x128xbf16>
    %cst_12 = arith.constant dense<0.000000e+00> : vector<2x128xf32>
    %28 = tpu.matmul %26, %27, %cst_12 {dimension_numbers = #tpu.dot_dimension_numbers<[1], [0], [0], [1], [0, 0, 1, 1], [], []>} : vector<2x1024xbf16>, vector<1024x128xbf16>, vector<2x128xf32> -> vector<2x128xf32>
    %c0_13 = arith.constant 0 : index
    %c0_14 = arith.constant 0 : index
    %29 = vector.load %arg4[%c0_13, %c0_14] : memref<1x128xf32, #tpu.memory_space<vmem>>, vector<1x128xf32>
    %30 = vector.broadcast %29 : vector<1x128xf32> to vector<2x128xf32>
    %31 = arith.addf %28, %30 : vector<2x128xf32>
    %cst_15 = arith.constant 0.000000e+00 : f32
    %32 = vector.broadcast %cst_15 : f32 to vector<2x128xf32>
    %33 = arith.maximumf %31, %32 : vector<2x128xf32>
    %34 = arith.truncf %33 : vector<2x128xf32> to vector<2x128xbf16>
    %c0_16 = arith.constant 0 : index
    %c0_17 = arith.constant 0 : index
    %35 = vector.load %arg5[%c0_16, %c0_17] : memref<128x128xbf16, #tpu.memory_space<vmem>>, vector<128x128xbf16>
    %cst_18 = arith.constant dense<0.000000e+00> : vector<2x128xf32>
    %36 = tpu.matmul %34, %35, %cst_18 {dimension_numbers = #tpu.dot_dimension_numbers<[1], [0], [0], [1], [0, 0, 1, 1], [], []>} : vector<2x128xbf16>, vector<128x128xbf16>, vector<2x128xf32> -> vector<2x128xf32>
    %c0_19 = arith.constant 0 : index
    %c0_20 = arith.constant 0 : index
    %37 = vector.load %arg6[%c0_19, %c0_20] : memref<1x128xf32, #tpu.memory_space<vmem>>, vector<1x128xf32>
    %38 = vector.broadcast %37 : vector<1x128xf32> to vector<2x128xf32>
    %39 = arith.addf %36, %38 : vector<2x128xf32>
    %c0_21 = arith.constant 0 : index
    %c0_22 = arith.constant 0 : index
    %40 = vector.load %arg7[%c0_21, %c0_22] : memref<2x128xf32, #tpu.memory_space<vmem>>, vector<2x128xf32>
    tpu.vector_store %arg7[%c0_21, %c0_22], %39 {strides = array<i32>} : memref<2x128xf32, #tpu.memory_space<vmem>>, vector<2x128xf32>,
    return
  }
  func.func @transform_0(%arg0: i32) -> (i32, i32) {
    %c0_i32 = arith.constant 0 : i32
    %c0_i32_0 = arith.constant 0 : i32
    return %arg0, %c0_i32 : i32, i32
  }
  func.func @transform_1(%arg0: i32) -> (i32, i32) {
    %c0_i32 = arith.constant 0 : i32
    %c0_i32_0 = arith.constant 0 : i32
    return %arg0, %c0_i32 : i32, i32
  }
  func.func @transform_2(%arg0: i32) -> (i32, i32) {
    %c0_i32 = arith.constant 0 : i32
    %c0_i32_0 = arith.constant 0 : i32
    %c0_i32_1 = arith.constant 0 : i32
    return %c0_i32, %c0_i32_0 : i32, i32
  }
  func.func @transform_3(%arg0: i32) -> (i32, i32) {
    %c0_i32 = arith.constant 0 : i32
    %c0_i32_0 = arith.constant 0 : i32
    %c0_i32_1 = arith.constant 0 : i32
    return %c0_i32, %c0_i32_0 : i32, i32
  }
  func.func @transform_4(%arg0: i32) -> (i32, i32) {
    %c0_i32 = arith.constant 0 : i32
    %c0_i32_0 = arith.constant 0 : i32
    %c0_i32_1 = arith.constant 0 : i32
    return %c0_i32, %c0_i32_0 : i32, i32
  }
  func.func @transform_5(%arg0: i32) -> (i32, i32) {
    %c0_i32 = arith.constant 0 : i32
    %c0_i32_0 = arith.constant 0 : i32
    %c0_i32_1 = arith.constant 0 : i32
    return %c0_i32, %c0_i32_0 : i32, i32
  }
  func.func @transform_6(%arg0: i32) -> (i32, i32) {
    %c0_i32 = arith.constant 0 : i32
    %c0_i32_0 = arith.constant 0 : i32
    return %arg0, %c0_i32 : i32, i32
  }
}

</mosaic_0001>

<llo_original>
// kernel: tpu_custom_call.1
$region0: #{tpu_custom_call.1}
  #allocation0 [shape = 'u32[]', space=smem, size = 0x4, offset = 0x4, fixed_abs, tag = 'smem constant byte address 0x4 - core index']
  #allocation1 [shape = 'u32[144,128]{1,0:T(1,128)}', space=vmem, size = 0x12000, scoped, tag = 'internal scratch']
  %s0 = inlined_call_operand.hbm [shape: f32[2,1024], index: 0, kind: input, shape index: {}]
  %s1 = inlined_call_operand.hbm [shape: f32[2,1024], index: 1, kind: input, shape index: {}]
  %s2 = inlined_call_operand.hbm [shape: bf16[1024,128], index: 2, kind: input, shape index: {}]
  %s3 = inlined_call_operand.vmem [shape: f32[1,128], index: 3, kind: input, shape index: {}]
  %s4 = inlined_call_operand.hbm [shape: bf16[128,128], index: 4, kind: input, shape index: {}]
  %s5 = inlined_call_operand.vmem [shape: f32[1,128], index: 5, kind: input, shape index: {}]
  %s6 = inlined_call_operand.hbm [shape: f32[2,128], index: 6, kind: output, shape index: {}]
  %s7 = sld [smem:[#allocation0]]
  $region50: #{tpu_custom_call.1} parent=0
    _
  %s9 = ssub.s32 1, %s7
  %s10 = scalar_select 0, %s9, %s7
  $region1: #{tpu_custom_call.1} parent=0
    #allocation2 [shape = 'u8[8192]{0}', space=vmem, size = 0x2000, scoped, tag = 'input window, operand 0, single buffered']
    #allocation3 [shape = 's32[1]{0}', space=sflag, size = 0x4, scoped, tag = 'scoped memory for tpu_custom_call.1']
    #allocation4 [shape = 's32[1]{0}', space=sflag, size = 0x4, scoped, tag = 'scoped memory for tpu_custom_call.1']
    #allocation5 [shape = 'u8[8192]{0}', space=vmem, size = 0x2000, scoped, tag = 'input window, operand 1, single buffered']
    #allocation6 [shape = 's32[1]{0}', space=sflag, size = 0x4, scoped, tag = 'scoped memory for tpu_custom_call.1']
    #allocation7 [shape = 'u8[262144]{0}', space=vmem, size = 0x40000, scoped, tag = 'input window, operand 2, single buffered']
    #allocation8 [shape = 'u8[32768]{0}', space=vmem, size = 0x8000, scoped, tag = 'input window, operand 4, single buffered']
    #allocation9 [shape = 's32[1]{0}', space=sflag, size = 0x4, scoped, tag = 'scoped memory for tpu_custom_call.1']
    #allocation10 [shape = 'u8[1024]{0}', space=vmem, size = 0x400, scoped, tag = 'output window, operand 0, single buffered']
    %11 = vsyncpa [#allocation3], 0
    %12 = vsyncpa [#allocation6], 0
    %13 = vsyncpa [#allocation9], 0
    %14 = vsyncpa [#allocation4], 0
    // Predicated region
    $region2: #{tpu_custom_call.1} parent=1 // pred_check
      _
    $region3: #{tpu_custom_call.1} parent=1 // pred_check_branch
      %16 = sbr.rel (0) target = $region5
    $region4: #{tpu_custom_call.1} parent=1 // pred_region
      %s18 = ssub.s32 256, 256
      %19 = vsyncadd [#allocation3], %s18
      %s21 = sshll.u32 [#allocation2], 4
      %s22 = int_to_ptr.vmem [resolvable:$true] %s21
      %24 = dma.hbm_to_vmem [thread:$0]  %s0, 256, %s22, [#allocation3]
    $region5: #{tpu_custom_call.1} parent=1 // pred_fallthru
      _
    // Predicated region
    $region6: #{tpu_custom_call.1} parent=1 // pred_check
      _
    $region7: #{tpu_custom_call.1} parent=1 // pred_check_branch
      %26 = sbr.rel (0) target = $region9
    $region8: #{tpu_custom_call.1} parent=1 // pred_region
      %s28 = ssub.s32 256, 256
      %29 = vsyncadd [#allocation6], %s28
      %s31 = sshll.u32 [#allocation5], 4
      %s32 = int_to_ptr.vmem [resolvable:$true] %s31
      %34 = dma.hbm_to_vmem [thread:$0]  %s1, 256, %s32, [#allocation6]
    $region9: #{tpu_custom_call.1} parent=1 // pred_fallthru
      _
    // Predicated region
    $region10: #{tpu_custom_call.1} parent=1 // pred_check
      _
    $region11: #{tpu_custom_call.1} parent=1 // pred_check_branch
      %36 = sbr.rel (0) target = $region13
    $region12: #{tpu_custom_call.1} parent=1 // pred_region
      %s38 = ssub.s32 8192, 8192
      %39 = vsyncadd [#allocation6], %s38
      %s40 = sshll.u32 [#allocation7], 4
      %s41 = int_to_ptr.vmem [resolvable:$true] %s40
      %46 = dma.hbm_to_vmem [thread:$0]  %s2, 8192, %s41, [#allocation6], 64, 64, 4
    $region13: #{tpu_custom_call.1} parent=1 // pred_fallthru
      _
    // Predicated region
    $region14: #{tpu_custom_call.1} parent=1 // pred_check
      _
    $region15: #{tpu_custom_call.1} parent=1 // pred_check_branch
      %48 = sbr.rel (0) target = $region17
    $region16: #{tpu_custom_call.1} parent=1 // pred_region
      _
    $region17: #{tpu_custom_call.1} parent=1 // pred_fallthru
      _
    // Predicated region
    $region18: #{tpu_custom_call.1} parent=1 // pred_check
      _
    $region19: #{tpu_custom_call.1} parent=1 // pred_check_branch
      %50 = sbr.rel (0) target = $region21
    $region20: #{tpu_custom_call.1} parent=1 // pred_region
      %s52 = ssub.s32 1024, 1024
      %53 = vsyncadd [#allocation9], %s52
      %s54 = sshll.u32 [#allocation8], 4
      %s55 = int_to_ptr.vmem [resolvable:$true] %s54
      %60 = dma.hbm_to_vmem [thread:$0]  %s4, 1024, %s55, [#allocation9], 64, 64, 4
    $region21: #{tpu_custom_call.1} parent=1 // pred_fallthru
      _
    // Predicated region
    $region22: #{tpu_custom_call.1} parent=1 // pred_check
      _
    $region23: #{tpu_custom_call.1} parent=1 // pred_check_branch
      %62 = sbr.rel (0) target = $region25
    $region24: #{tpu_custom_call.1} parent=1 // pred_region
      _
    $region25: #{tpu_custom_call.1} parent=1 // pred_fallthru
      _
    // Predicated region
    $region26: #{tpu_custom_call.1} parent=1 // pred_check
      _
    $region27: #{tpu_custom_call.1} parent=1 // pred_check_branch
      %64 = sbr.rel (0) target = $region29
    $region28: #{tpu_custom_call.1} parent=1 // pred_region
      %65 = dma.done [#allocation3], 256
    $region29: #{tpu_custom_call.1} parent=1 // pred_fallthru
      _
    // Predicated region
    $region30: #{tpu_custom_call.1} parent=1 // pred_check
      _
    $region31: #{tpu_custom_call.1} parent=1 // pred_check_branch
      %67 = sbr.rel (0) target = $region33
    $region32: #{tpu_custom_call.1} parent=1 // pred_region
      %68 = dma.done [#allocation6], 256
    $region33: #{tpu_custom_call.1} parent=1 // pred_fallthru
      _
    // Predicated region
    $region34: #{tpu_custom_call.1} parent=1 // pred_check
      _
    $region35: #{tpu_custom_call.1} parent=1 // pred_check_branch
      %70 = sbr.rel (0) target = $region37
    $region36: #{tpu_custom_call.1} parent=1 // pred_region
      %71 = dma.done [#allocation6], 8192
    $region37: #{tpu_custom_call.1} parent=1 // pred_fallthru
      _
    // Predicated region
    $region38: #{tpu_custom_call.1} parent=1 // pred_check
      _
    $region39: #{tpu_custom_call.1} parent=1 // pred_check_branch
      %73 = sbr.rel (0) target = $region41
    $region40: #{tpu_custom_call.1} parent=1 // pred_region
      %74 = dma.done [#allocation9], 1024
    $region41: #{tpu_custom_call.1} parent=1 // pred_fallthru
      _
    %v76 = vld [vmem:[#allocation2] sm:$0xff]
    %v77 = vld [vmem:[#allocation2 + $0x8] sm:$0xff]
    %v78 = vld [vmem:[#allocation5] sm:$0xff]
    %v79 = vld [vmem:[#allocation5 + $0x8] sm:$0xff]
    %v80 = vadd.f32 %v78, 1e-20
    %v81 = vadd.f32 %v79, 1e-20
    %v82 = vsub.f32 1.0, %v78
    %v83 = vsub.f32 1.0, %v79
    %v84 = vadd.f32 %v82, 1e-20
    %v85 = vadd.f32 %v83, 1e-20
    %v86 = vrcp.pop %v84
    %v87 = vmul.f32 %v80, %v86
    %v88 = vrcp.pop %v85
    %v89 = vmul.f32 %v81, %v88
    %v90 = vlog2.pop %v87
    %v91 = vmul.f32 %v90, 0.6931472
    %v92 = vlog2.pop %v89
    %v93 = vmul.f32 %v92, 0.6931472
    %v94 = vadd.f32 %v76, 1e-20
    %v95 = vadd.f32 %v77, 1e-20
    %v96 = vsub.f32 1.0, %v76
    %v97 = vsub.f32 1.0, %v77
    %v98 = vadd.f32 %v96, 1e-20
    %v99 = vadd.f32 %v97, 1e-20
    %v100 = vrcp.pop %v98
    %v101 = vmul.f32 %v94, %v100
    %v102 = vrcp.pop %v99
    %v103 = vmul.f32 %v95, %v102
    %v104 = vlog2.pop %v101
    %v105 = vmul.f32 %v104, 0.6931472
    %v106 = vlog2.pop %v103
    %v107 = vmul.f32 %v106, 0.6931472
    %v108 = vadd.f32 %v91, %v105
    %v109 = vadd.f32 %v93, %v107
    %v110 = vmul.f32 %v108, 100.0
    %v111 = vmul.f32 %v109, 100.0
    %v112 = vxor.u32 %v110, 2147483648
    %v113 = vxor.u32 %v111, 2147483648
    %v114 = vmul.f32 %v112, 1.442695
    %v115 = vpow.pop %v114
    %v116 = vmul.f32 %v113, 1.442695
    %v117 = vpow.pop %v116
    %v118 = vadd.f32 %v115, 1.0
    %v119 = vadd.f32 %v117, 1.0
    %v120 = vrcp.pop %v118
    %v121 = vmul.f32 1.0, %v120
    %v122 = vrcp.pop %v119
    %v123 = vmul.f32 1.0, %v122
    %v126 = vcombine.high %v121, %v121
    %v128 = vunpack.c.l.s4 1983009808
    %v129 = vunpack.c.0.s8 %v128
    %v130 = vlaneseq
    %v131 = vshrl.u32 %v130, 7
    %v132 = vsub.s32 %v129, %v131
    %v133 = vrot.slane %v121, %v132
    %v135 = vunpack.c.l.s4 1983009808
    %v136 = vunpack.c.0.s8 %v135
    %v137 = vlaneseq
    %v138 = vshrl.u32 %v137, 7
    %v139 = vsub.s32 %v136, %v138
    %v140 = vrot.slane %v126, %v139
    %v141 = vcombine.high %v133, %v133
    %v142 = vcombine.high %v140, %v140
    %v143 = vcombine.high %v123, %v123
    %v145 = vunpack.c.l.s4 1983009808
    %v146 = vunpack.c.0.s8 %v145
    %v147 = vlaneseq
    %v148 = vshrl.u32 %v147, 7
    %v149 = vsub.s32 %v146, %v148
    %v150 = vrot.slane %v123, %v149
    %v152 = vunpack.c.l.s4 1983009808
    %v153 = vunpack.c.0.s8 %v152
    %v154 = vlaneseq
    %v155 = vshrl.u32 %v154, 7
    %v156 = vsub.s32 %v153, %v155
    %v157 = vrot.slane %v143, %v156
    %v158 = vcombine.high %v150, %v150
    %v159 = vcombine.high %v157, %v157
    %v168 = vpack.c.bf16 %v133, %v133
    %v169 = vpack.c.bf16 %v141, %v141
    %v170 = vpack.c.bf16 %v140, %v140
    %v171 = vpack.c.bf16 %v142, %v142
    %v172 = vpack.c.bf16 %v150, %v150
    %v173 = vpack.c.bf16 %v158, %v158
    %v174 = vpack.c.bf16 %v157, %v157
    %v175 = vpack.c.bf16 %v159, %v159
    %v176 = vld [vmem:[#allocation7] sm:$0xf]
    %v177 = vld [vmem:[#allocation7 + $0x4] sm:$0xf]
    %v178 = vld [vmem:[#allocation7 + $0x8] sm:$0xf]
    %v179 = vld [vmem:[#allocation7 + $0xc] sm:$0xf]
    %v180 = vld [vmem:[#allocation7 + $0x10] sm:$0xf]
    %v181 = vld [vmem:[#allocation7 + $0x14] sm:$0xf]
    %v182 = vld [vmem:[#allocation7 + $0x18] sm:$0xf]
    %v183 = vld [vmem:[#allocation7 + $0x1c] sm:$0xf]
    %v184 = vld [vmem:[#allocation7 + $0x20] sm:$0xf]
    %v185 = vld [vmem:[#allocation7 + $0x24] sm:$0xf]
    %v186 = vld [vmem:[#allocation7 + $0x28] sm:$0xf]
    %v187 = vld [vmem:[#allocation7 + $0x2c] sm:$0xf]
    %v188 = vld [vmem:[#allocation7 + $0x30] sm:$0xf]
    %v189 = vld [vmem:[#allocation7 + $0x34] sm:$0xf]
    %v190 = vld [vmem:[#allocation7 + $0x38] sm:$0xf]
    %v191 = vld [vmem:[#allocation7 + $0x3c] sm:$0xf]
    %v192 = vld [vmem:[#allocation7 + $0x40] sm:$0xf]
    %v193 = vld [vmem:[#allocation7 + $0x44] sm:$0xf]
    %v194 = vld [vmem:[#allocation7 + $0x48] sm:$0xf]
    %v195 = vld [vmem:[#allocation7 + $0x4c] sm:$0xf]
    %v196 = vld [vmem:[#allocation7 + $0x50] sm:$0xf]
    %v197 = vld [vmem:[#allocation7 + $0x54] sm:$0xf]
    %v198 = vld [vmem:[#allocation7 + $0x58] sm:$0xf]
    %v199 = vld [vmem:[#allocation7 + $0x5c] sm:$0xf]
    %v200 = vld [vmem:[#allocation7 + $0x60] sm:$0xf]
    %v201 = vld [vmem:[#allocation7 + $0x64] sm:$0xf]
    %v202 = vld [vmem:[#allocation7 + $0x68] sm:$0xf]
    %v203 = vld [vmem:[#allocation7 + $0x6c] sm:$0xf]
    %v204 = vld [vmem:[#allocation7 + $0x70] sm:$0xf]
    %v205 = vld [vmem:[#allocation7 + $0x74] sm:$0xf]
    %v206 = vld [vmem:[#allocation7 + $0x78] sm:$0xf]
    %v207 = vld [vmem:[#allocation7 + $0x7c] sm:$0xf]
    %v208 = vld [vmem:[#allocation7 + $0x80] sm:$0xf]
    %v209 = vld [vmem:[#allocation7 + $0x84] sm:$0xf]
    %v210 = vld [vmem:[#allocation7 + $0x88] sm:$0xf]
    %v211 = vld [vmem:[#allocation7 + $0x8c] sm:$0xf]
    %v212 = vld [vmem:[#allocation7 + $0x90] sm:$0xf]
    %v213 = vld [vmem:[#allocation7 + $0x94] sm:$0xf]
    %v214 = vld [vmem:[#allocation7 + $0x98] sm:$0xf]
    %v215 = vld [vmem:[#allocation7 + $0x9c] sm:$0xf]
    %v216 = vld [vmem:[#allocation7 + $0xa0] sm:$0xf]
    %v217 = vld [vmem:[#allocation7 + $0xa4] sm:$0xf]
    %v218 = vld [vmem:[#allocation7 + $0xa8] sm:$0xf]
    %v219 = vld [vmem:[#allocation7 + $0xac] sm:$0xf]
    %v220 = vld [vmem:[#allocation7 + $0xb0] sm:$0xf]
    %v221 = vld [vmem:[#allocation7 + $0xb4] sm:$0xf]
    %v222 = vld [vmem:[#allocation7 + $0xb8] sm:$0xf]
    %v223 = vld [vmem:[#allocation7 + $0xbc] sm:$0xf]
    %v224 = vld [vmem:[#allocation7 + $0xc0] sm:$0xf]
    %v225 = vld [vmem:[#allocation7 + $0xc4] sm:$0xf]
    %v226 = vld [vmem:[#allocation7 + $0xc8] sm:$0xf]
    %v227 = vld [vmem:[#allocation7 + $0xcc] sm:$0xf]
    %v228 = vld [vmem:[#allocation7 + $0xd0] sm:$0xf]
    %v229 = vld [vmem:[#allocation7 + $0xd4] sm:$0xf]
    %v230 = vld [vmem:[#allocation7 + $0xd8] sm:$0xf]
    %v231 = vld [vmem:[#allocation7 + $0xdc] sm:$0xf]
    %v232 = vld [vmem:[#allocation7 + $0xe0] sm:$0xf]
    %v233 = vld [vmem:[#allocation7 + $0xe4] sm:$0xf]
    %v234 = vld [vmem:[#allocation7 + $0xe8] sm:$0xf]
    %v235 = vld [vmem:[#allocation7 + $0xec] sm:$0xf]
    %v236 = vld [vmem:[#allocation7 + $0xf0] sm:$0xf]
    %v237 = vld [vmem:[#allocation7 + $0xf4] sm:$0xf]
    %v238 = vld [vmem:[#allocation7 + $0xf8] sm:$0xf]
    %v239 = vld [vmem:[#allocation7 + $0xfc] sm:$0xf]
    %v240 = vld [vmem:[#allocation7 + $0x100] sm:$0xf]
    %v241 = vld [vmem:[#allocation7 + $0x104] sm:$0xf]
    %v242 = vld [vmem:[#allocation7 + $0x108] sm:$0xf]
    %v243 = vld [vmem:[#allocation7 + $0x10c] sm:$0xf]
    %v244 = vld [vmem:[#allocation7 + $0x110] sm:$0xf]
    %v245 = vld [vmem:[#allocation7 + $0x114] sm:$0xf]
    %v246 = vld [vmem:[#allocation7 + $0x118] sm:$0xf]
    %v247 = vld [vmem:[#allocation7 + $0x11c] sm:$0xf]
    %v248 = vld [vmem:[#allocation7 + $0x120] sm:$0xf]
    %v249 = vld [vmem:[#allocation7 + $0x124] sm:$0xf]
    %v250 = vld [vmem:[#allocation7 + $0x128] sm:$0xf]
    %v251 = vld [vmem:[#allocation7 + $0x12c] sm:$0xf]
    %v252 = vld [vmem:[#allocation7 + $0x130] sm:$0xf]
    %v253 = vld [vmem:[#allocation7 + $0x134] sm:$0xf]
    %v254 = vld [vmem:[#allocation7 + $0x138] sm:$0xf]
    %v255 = vld [vmem:[#allocation7 + $0x13c] sm:$0xf]
    %v256 = vld [vmem:[#allocation7 + $0x140] sm:$0xf]
    %v257 = vld [vmem:[#allocation7 + $0x144] sm:$0xf]
    %v258 = vld [vmem:[#allocation7 + $0x148] sm:$0xf]
    %v259 = vld [vmem:[#allocation7 + $0x14c] sm:$0xf]
    %v260 = vld [vmem:[#allocation7 + $0x150] sm:$0xf]
    %v261 = vld [vmem:[#allocation7 + $0x154] sm:$0xf]
    %v262 = vld [vmem:[#allocation7 + $0x158] sm:$0xf]
    %v263 = vld [vmem:[#allocation7 + $0x15c] sm:$0xf]
    %v264 = vld [vmem:[#allocation7 + $0x160] sm:$0xf]
    %v265 = vld [vmem:[#allocation7 + $0x164] sm:$0xf]
    %v266 = vld [vmem:[#allocation7 + $0x168] sm:$0xf]
    %v267 = vld [vmem:[#allocation7 + $0x16c] sm:$0xf]
    %v268 = vld [vmem:[#allocation7 + $0x170] sm:$0xf]
    %v269 = vld [vmem:[#allocation7 + $0x174] sm:$0xf]
    %v270 = vld [vmem:[#allocation7 + $0x178] sm:$0xf]
    %v271 = vld [vmem:[#allocation7 + $0x17c] sm:$0xf]
    %v272 = vld [vmem:[#allocation7 + $0x180] sm:$0xf]
    %v273 = vld [vmem:[#allocation7 + $0x184] sm:$0xf]
    %v274 = vld [vmem:[#allocation7 + $0x188] sm:$0xf]
    %v275 = vld [vmem:[#allocation7 + $0x18c] sm:$0xf]
    %v276 = vld [vmem:[#allocation7 + $0x190] sm:$0xf]
    %v277 = vld [vmem:[#allocation7 + $0x194] sm:$0xf]
    %v278 = vld [vmem:[#allocation7 + $0x198] sm:$0xf]
    %v279 = vld [vmem:[#allocation7 + $0x19c] sm:$0xf]
    %v280 = vld [vmem:[#allocation7 + $0x1a0] sm:$0xf]
    %v281 = vld [vmem:[#allocation7 + $0x1a4] sm:$0xf]
    %v282 = vld [vmem:[#allocation7 + $0x1a8] sm:$0xf]
    %v283 = vld [vmem:[#allocation7 + $0x1ac] sm:$0xf]
    %v284 = vld [vmem:[#allocation7 + $0x1b0] sm:$0xf]
    %v285 = vld [vmem:[#allocation7 + $0x1b4] sm:$0xf]
    %v286 = vld [vmem:[#allocation7 + $0x1b8] sm:$0xf]
    %v287 = vld [vmem:[#allocation7 + $0x1bc] sm:$0xf]
    %v288 = vld [vmem:[#allocation7 + $0x1c0] sm:$0xf]
    %v289 = vld [vmem:[#allocation7 + $0x1c4] sm:$0xf]
    %v290 = vld [vmem:[#allocation7 + $0x1c8] sm:$0xf]
    %v291 = vld [vmem:[#allocation7 + $0x1cc] sm:$0xf]
    %v292 = vld [vmem:[#allocation7 + $0x1d0] sm:$0xf]
    %v293 = vld [vmem:[#allocation7 + $0x1d4] sm:$0xf]
    %v294 = vld [vmem:[#allocation7 + $0x1d8] sm:$0xf]
    %v295 = vld [vmem:[#allocation7 + $0x1dc] sm:$0xf]
    %v296 = vld [vmem:[#allocation7 + $0x1e0] sm:$0xf]
    %v297 = vld [vmem:[#allocation7 + $0x1e4] sm:$0xf]
    %v298 = vld [vmem:[#allocation7 + $0x1e8] sm:$0xf]
    %v299 = vld [vmem:[#allocation7 + $0x1ec] sm:$0xf]
    %v300 = vld [vmem:[#allocation7 + $0x1f0] sm:$0xf]
    %v301 = vld [vmem:[#allocation7 + $0x1f4] sm:$0xf]
    %v302 = vld [vmem:[#allocation7 + $0x1f8] sm:$0xf]
    %v303 = vld [vmem:[#allocation7 + $0x1fc] sm:$0xf]
    %v304 = vld [vmem:[%s3] sm:$0x1]
    %v306 = vlaneseq
    %v307 = vshrl.u32 %v306, 7
    %v308 = vsub.s32 0, %v307
    %v309 = vrot.slane %v304, %v308
    %v439 = vunpack.c.l.b16 %v176
    %v440 = vunpack.c.l.b16 %v177
    %v441 = vunpack.c.l.b16 %v178
    %v442 = vunpack.c.l.b16 %v179
    %v443 = vunpack.c.l.b16 %v180
    %v444 = vunpack.c.l.b16 %v181
    %v445 = vunpack.c.l.b16 %v182
    %v446 = vunpack.c.l.b16 %v183
    %v447 = vunpack.c.l.b16 %v184
    %v448 = vunpack.c.l.b16 %v185
    %v449 = vunpack.c.l.b16 %v186
    %v450 = vunpack.c.l.b16 %v187
    %v451 = vunpack.c.l.b16 %v188
    %v452 = vunpack.c.l.b16 %v189
    %v453 = vunpack.c.l.b16 %v190
    %v454 = vunpack.c.l.b16 %v191
    %v455 = vunpack.c.l.b16 %v192
    %v456 = vunpack.c.l.b16 %v193
    %v457 = vunpack.c.l.b16 %v194
    %v458 = vunpack.c.l.b16 %v195
    %v459 = vunpack.c.l.b16 %v196
    %v460 = vunpack.c.l.b16 %v197
    %v461 = vunpack.c.l.b16 %v198
    %v462 = vunpack.c.l.b16 %v199
    %v463 = vunpack.c.l.b16 %v200
    %v464 = vunpack.c.l.b16 %v201
    %v465 = vunpack.c.l.b16 %v202
    %v466 = vunpack.c.l.b16 %v203
    %v467 = vunpack.c.l.b16 %v204
    %v468 = vunpack.c.l.b16 %v205
    %v469 = vunpack.c.l.b16 %v206
    %v470 = vunpack.c.l.b16 %v207
    %v471 = vunpack.c.l.b16 %v208
    %v472 = vunpack.c.l.b16 %v209
    %v473 = vunpack.c.l.b16 %v210
    %v474 = vunpack.c.l.b16 %v211
    %v475 = vunpack.c.l.b16 %v212
    %v476 = vunpack.c.l.b16 %v213
    %v477 = vunpack.c.l.b16 %v214
    %v478 = vunpack.c.l.b16 %v215
    %v479 = vunpack.c.l.b16 %v216
    %v480 = vunpack.c.l.b16 %v217
    %v481 = vunpack.c.l.b16 %v218
    %v482 = vunpack.c.l.b16 %v219
    %v483 = vunpack.c.l.b16 %v220
    %v484 = vunpack.c.l.b16 %v221
    %v485 = vunpack.c.l.b16 %v222
    %v486 = vunpack.c.l.b16 %v223
    %v487 = vunpack.c.l.b16 %v224
    %v488 = vunpack.c.l.b16 %v225
    %v489 = vunpack.c.l.b16 %v226
    %v490 = vunpack.c.l.b16 %v227
    %v491 = vunpack.c.l.b16 %v228
    %v492 = vunpack.c.l.b16 %v229
    %v493 = vunpack.c.l.b16 %v230
    %v494 = vunpack.c.l.b16 %v231
    %v495 = vunpack.c.l.b16 %v232
    %v496 = vunpack.c.l.b16 %v233
    %v497 = vunpack.c.l.b16 %v234
    %v498 = vunpack.c.l.b16 %v235
    %v499 = vunpack.c.l.b16 %v236
    %v500 = vunpack.c.l.b16 %v237
    %v501 = vunpack.c.l.b16 %v238
    %v502 = vunpack.c.l.b16 %v239
    %v503 = vunpack.c.l.b16 %v240
    %v504 = vunpack.c.l.b16 %v241
    %v505 = vunpack.c.l.b16 %v242
    %v506 = vunpack.c.l.b16 %v243
    %v507 = vunpack.c.l.b16 %v244
    %v508 = vunpack.c.l.b16 %v245
    %v509 = vunpack.c.l.b16 %v246
    %v510 = vunpack.c.l.b16 %v247
    %v511 = vunpack.c.l.b16 %v248
    %v512 = vunpack.c.l.b16 %v249
    %v513 = vunpack.c.l.b16 %v250
    %v514 = vunpack.c.l.b16 %v251
    %v515 = vunpack.c.l.b16 %v252
    %v516 = vunpack.c.l.b16 %v253
    %v517 = vunpack.c.l.b16 %v254
    %v518 = vunpack.c.l.b16 %v255
    %v519 = vunpack.c.l.b16 %v256
    %v520 = vunpack.c.l.b16 %v257
    %v521 = vunpack.c.l.b16 %v258
    %v522 = vunpack.c.l.b16 %v259
    %v523 = vunpack.c.l.b16 %v260
    %v524 = vunpack.c.l.b16 %v261
    %v525 = vunpack.c.l.b16 %v262
    %v526 = vunpack.c.l.b16 %v263
    %v527 = vunpack.c.l.b16 %v264
    %v528 = vunpack.c.l.b16 %v265
    %v529 = vunpack.c.l.b16 %v266
    %v530 = vunpack.c.l.b16 %v267
    %v531 = vunpack.c.l.b16 %v268
    %v532 = vunpack.c.l.b16 %v269
    %v533 = vunpack.c.l.b16 %v270
    %v534 = vunpack.c.l.b16 %v271
    %v535 = vunpack.c.l.b16 %v272
    %v536 = vunpack.c.l.b16 %v273
    %v537 = vunpack.c.l.b16 %v274
    %v538 = vunpack.c.l.b16 %v275
    %v539 = vunpack.c.l.b16 %v276
    %v540 = vunpack.c.l.b16 %v277
    %v541 = vunpack.c.l.b16 %v278
    %v542 = vunpack.c.l.b16 %v279
    %v543 = vunpack.c.l.b16 %v280
    %v544 = vunpack.c.l.b16 %v281
    %v545 = vunpack.c.l.b16 %v282
    %v546 = vunpack.c.l.b16 %v283
    %v547 = vunpack.c.l.b16 %v284
    %v548 = vunpack.c.l.b16 %v285
    %v549 = vunpack.c.l.b16 %v286
    %v550 = vunpack.c.l.b16 %v287
    %v551 = vunpack.c.l.b16 %v288
    %v552 = vunpack.c.l.b16 %v289
    %v553 = vunpack.c.l.b16 %v290
    %v554 = vunpack.c.l.b16 %v291
    %v555 = vunpack.c.l.b16 %v292
    %v556 = vunpack.c.l.b16 %v293
    %v557 = vunpack.c.l.b16 %v294
    %v558 = vunpack.c.l.b16 %v295
    %v559 = vunpack.c.l.b16 %v296
    %v560 = vunpack.c.l.b16 %v297
    %v561 = vunpack.c.l.b16 %v298
    %v562 = vunpack.c.l.b16 %v299
    %v563 = vunpack.c.l.b16 %v300
    %v564 = vunpack.c.l.b16 %v301
    %v565 = vunpack.c.l.b16 %v302
    %v566 = vunpack.c.l.b16 %v303
    %v567 = vpack.c.b16 %v440, %v439
    %v568 = vpack.c.b16 %v442, %v441
    %v569 = vpack.c.b16 %v444, %v443
    %v570 = vpack.c.b16 %v446, %v445
    %v571 = vpack.c.b16 %v448, %v447
    %v572 = vpack.c.b16 %v450, %v449
    %v573 = vpack.c.b16 %v452, %v451
    %v574 = vpack.c.b16 %v454, %v453
    %v575 = vpack.c.b16 %v456, %v455
    %v576 = vpack.c.b16 %v458, %v457
    %v577 = vpack.c.b16 %v460, %v459
    %v578 = vpack.c.b16 %v462, %v461
    %v579 = vpack.c.b16 %v464, %v463
    %v580 = vpack.c.b16 %v466, %v465
    %v581 = vpack.c.b16 %v468, %v467
    %v582 = vpack.c.b16 %v470, %v469
    %v583 = vpack.c.b16 %v472, %v471
    %v584 = vpack.c.b16 %v474, %v473
    %v585 = vpack.c.b16 %v476, %v475
    %v586 = vpack.c.b16 %v478, %v477
    %v587 = vpack.c.b16 %v480, %v479
    %v588 = vpack.c.b16 %v482, %v481
    %v589 = vpack.c.b16 %v484, %v483
    %v590 = vpack.c.b16 %v486, %v485
    %v591 = vpack.c.b16 %v488, %v487
    %v592 = vpack.c.b16 %v490, %v489
    %v593 = vpack.c.b16 %v492, %v491
    %v594 = vpack.c.b16 %v494, %v493
    %v595 = vpack.c.b16 %v496, %v495
    %v596 = vpack.c.b16 %v498, %v497
    %v597 = vpack.c.b16 %v500, %v499
    %v598 = vpack.c.b16 %v502, %v501
    %v599 = vpack.c.b16 %v504, %v503
    %v600 = vpack.c.b16 %v506, %v505
    %v601 = vpack.c.b16 %v508, %v507
    %v602 = vpack.c.b16 %v510, %v509
    %v603 = vpack.c.b16 %v512, %v511
    %v604 = vpack.c.b16 %v514, %v513
    %v605 = vpack.c.b16 %v516, %v515
    %v606 = vpack.c.b16 %v518, %v517
    %v607 = vpack.c.b16 %v520, %v519
    %v608 = vpack.c.b16 %v522, %v521
    %v609 = vpack.c.b16 %v524, %v523
    %v610 = vpack.c.b16 %v526, %v525
    %v611 = vpack.c.b16 %v528, %v527
    %v612 = vpack.c.b16 %v530, %v529
    %v613 = vpack.c.b16 %v532, %v531
    %v614 = vpack.c.b16 %v534, %v533
    %v615 = vpack.c.b16 %v536, %v535
    %v616 = vpack.c.b16 %v538, %v537
    %v617 = vpack.c.b16 %v540, %v539
    %v618 = vpack.c.b16 %v542, %v541
    %v619 = vpack.c.b16 %v544, %v543
    %v620 = vpack.c.b16 %v546, %v545
    %v621 = vpack.c.b16 %v548, %v547
    %v622 = vpack.c.b16 %v550, %v549
    %v623 = vpack.c.b16 %v552, %v551
    %v624 = vpack.c.b16 %v554, %v553
    %v625 = vpack.c.b16 %v556, %v555
    %v626 = vpack.c.b16 %v558, %v557
    %v627 = vpack.c.b16 %v560, %v559
    %v628 = vpack.c.b16 %v562, %v561
    %v629 = vpack.c.b16 %v564, %v563
    %v630 = vpack.c.b16 %v566, %v565
    %695 = vmatprep.subr.bf16.mxu0 0
    %696 = vmatpush1.bf16.msra.mxu0 %v567
    %697 = vmatprep.subr.bf16.mxu0 0
    %698 = vmatpush1.bf16.msra.mxu0 %v568
    %699 = vmatprep.subr.bf16.mxu0 0
    %700 = vmatpush1.bf16.msra.mxu0 %v569
    %701 = vmatprep.subr.bf16.mxu0 0
    %702 = vmatpush1.bf16.msra.mxu0 %v570
    %703 = vmatprep.subr.bf16.mxu0 0
    %704 = vmatpush1.bf16.msra.mxu0 %v571
    %705 = vmatprep.subr.bf16.mxu0 0
    %706 = vmatpush1.bf16.msra.mxu0 %v572
    %707 = vmatprep.subr.bf16.mxu0 0
    %708 = vmatpush1.bf16.msra.mxu0 %v573
    %709 = vmatprep.subr.bf16.mxu0 0
    %710 = vmatpush1.bf16.msra.mxu0 %v574
    %711 = vmatprep.subr.bf16.mxu0 0
    %712 = vmatpush1.bf16.msra.mxu0 %v575
    %713 = vmatprep.subr.bf16.mxu0 0
    %714 = vmatpush1.bf16.msra.mxu0 %v576
    %715 = vmatprep.subr.bf16.mxu0 0
    %716 = vmatpush1.bf16.msra.mxu0 %v577
    %717 = vmatprep.subr.bf16.mxu0 0
    %718 = vmatpush1.bf16.msra.mxu0 %v578
    %719 = vmatprep.subr.bf16.mxu0 0
    %720 = vmatpush1.bf16.msra.mxu0 %v579
    %721 = vmatprep.subr.bf16.mxu0 0
    %722 = vmatpush1.bf16.msra.mxu0 %v580
    %723 = vmatprep.subr.bf16.mxu0 0
    %724 = vmatpush1.bf16.msra.mxu0 %v581
    %725 = vmatprep.subr.bf16.mxu0 0
    %726 = vmatpush1.bf16.msra.mxu0 %v582
    %727 = vmatprep.mubr.bf16.mxu0 %v169
    %728 = vmatmul.mubr.bf16.gmra.mrb[0].mxu0 %v168
    %v729 = vpop.f32.mrb[0].mxu0
    %v730 = vadd.f32 %v309, %v729
    %v731 = vpop.f32.mrb[0].mxu0
    %v732 = vpop.f32.mrb[0].mxu0
    %v733 = vpop.f32.mrb[0].mxu0
    %734 = vdwg.mxu0
    %735 = vmatprep.subr.bf16.mxu0 0
    %736 = vmatpush1.bf16.msra.mxu0 %v583
    %737 = vmatprep.subr.bf16.mxu0 0
    %738 = vmatpush1.bf16.msra.mxu0 %v584
    %739 = vmatprep.subr.bf16.mxu0 0
    %740 = vmatpush1.bf16.msra.mxu0 %v585
    %741 = vmatprep.subr.bf16.mxu0 0
    %742 = vmatpush1.bf16.msra.mxu0 %v586
    %743 = vmatprep.subr.bf16.mxu0 0
    %744 = vmatpush1.bf16.msra.mxu0 %v587
    %745 = vmatprep.subr.bf16.mxu0 0
    %746 = vmatpush1.bf16.msra.mxu0 %v588
    %747 = vmatprep.subr.bf16.mxu0 0
    %748 = vmatpush1.bf16.msra.mxu0 %v589
    %749 = vmatprep.subr.bf16.mxu0 0
    %750 = vmatpush1.bf16.msra.mxu0 %v590
    %751 = vmatprep.subr.bf16.mxu0 0
    %752 = vmatpush1.bf16.msra.mxu0 %v591
    %753 = vmatprep.subr.bf16.mxu0 0
    %754 = vmatpush1.bf16.msra.mxu0 %v592
    %755 = vmatprep.subr.bf16.mxu0 0
    %756 = vmatpush1.bf16.msra.mxu0 %v593
    %757 = vmatprep.subr.bf16.mxu0 0
    %758 = vmatpush1.bf16.msra.mxu0 %v594
    %759 = vmatprep.subr.bf16.mxu0 0
    %760 = vmatpush1.bf16.msra.mxu0 %v595
    %761 = vmatprep.subr.bf16.mxu0 0
    %762 = vmatpush1.bf16.msra.mxu0 %v596
    %763 = vmatprep.subr.bf16.mxu0 0
    %764 = vmatpush1.bf16.msra.mxu0 %v597
    %765 = vmatprep.subr.bf16.mxu0 0
    %766 = vmatpush1.bf16.msra.mxu0 %v598
    %767 = vmatprep.mubr.bf16.mxu0 %v171
    %768 = vmatmul.mubr.bf16.gmra.mrb[0].mxu0 %v170
    %v769 = vpop.f32.mrb[0].mxu0
    %v770 = vadd.f32 %v730, %v769
    %v771 = vpop.f32.mrb[0].mxu0
    %v772 = vpop.f32.mrb[0].mxu0
    %v773 = vpop.f32.mrb[0].mxu0
    %774 = vdwg.mxu0
    %775 = vmatprep.subr.bf16.mxu0 0
    %776 = vmatpush1.bf16.msra.mxu0 %v599
    %777 = vmatprep.subr.bf16.mxu0 0
    %778 = vmatpush1.bf16.msra.mxu0 %v600
    %779 = vmatprep.subr.bf16.mxu0 0
    %780 = vmatpush1.bf16.msra.mxu0 %v601
    %781 = vmatprep.subr.bf16.mxu0 0
    %782 = vmatpush1.bf16.msra.mxu0 %v602
    %783 = vmatprep.subr.bf16.mxu0 0
    %784 = vmatpush1.bf16.msra.mxu0 %v603
    %785 = vmatprep.subr.bf16.mxu0 0
    %786 = vmatpush1.bf16.msra.mxu0 %v604
    %787 = vmatprep.subr.bf16.mxu0 0
    %788 = vmatpush1.bf16.msra.mxu0 %v605
    %789 = vmatprep.subr.bf16.mxu0 0
    %790 = vmatpush1.bf16.msra.mxu0 %v606
    %791 = vmatprep.subr.bf16.mxu0 0
    %792 = vmatpush1.bf16.msra.mxu0 %v607
    %793 = vmatprep.subr.bf16.mxu0 0
    %794 = vmatpush1.bf16.msra.mxu0 %v608
    %795 = vmatprep.subr.bf16.mxu0 0
    %796 = vmatpush1.bf16.msra.mxu0 %v609
    %797 = vmatprep.subr.bf16.mxu0 0
    %798 = vmatpush1.bf16.msra.mxu0 %v610
    %799 = vmatprep.subr.bf16.mxu0 0
    %800 = vmatpush1.bf16.msra.mxu0 %v611
    %801 = vmatprep.subr.bf16.mxu0 0
    %802 = vmatpush1.bf16.msra.mxu0 %v612
    %803 = vmatprep.subr.bf16.mxu0 0
    %804 = vmatpush1.bf16.msra.mxu0 %v613
    %805 = vmatprep.subr.bf16.mxu0 0
    %806 = vmatpush1.bf16.msra.mxu0 %v614
    %807 = vmatprep.mubr.bf16.mxu0 %v173
    %808 = vmatmul.mubr.bf16.gmra.mrb[0].mxu0 %v172
    %v809 = vpop.f32.mrb[0].mxu0
    %v810 = vadd.f32 %v770, %v809
    %v811 = vpop.f32.mrb[0].mxu0
    %v812 = vpop.f32.mrb[0].mxu0
    %v813 = vpop.f32.mrb[0].mxu0
    %814 = vdwg.mxu0
    %815 = vmatprep.subr.bf16.mxu0 0
    %816 = vmatpush1.bf16.msra.mxu0 %v615
    %817 = vmatprep.subr.bf16.mxu0 0
    %818 = vmatpush1.bf16.msra.mxu0 %v616
    %819 = vmatprep.subr.bf16.mxu0 0
    %820 = vmatpush1.bf16.msra.mxu0 %v617
    %821 = vmatprep.subr.bf16.mxu0 0
    %822 = vmatpush1.bf16.msra.mxu0 %v618
    %823 = vmatprep.subr.bf16.mxu0 0
    %824 = vmatpush1.bf16.msra.mxu0 %v619
    %825 = vmatprep.subr.bf16.mxu0 0
    %826 = vmatpush1.bf16.msra.mxu0 %v620
    %827 = vmatprep.subr.bf16.mxu0 0
    %828 = vmatpush1.bf16.msra.mxu0 %v621
    %829 = vmatprep.subr.bf16.mxu0 0
    %830 = vmatpush1.bf16.msra.mxu0 %v622
    %831 = vmatprep.subr.bf16.mxu0 0
    %832 = vmatpush1.bf16.msra.mxu0 %v623
    %833 = vmatprep.subr.bf16.mxu0 0
    %834 = vmatpush1.bf16.msra.mxu0 %v624
    %835 = vmatprep.subr.bf16.mxu0 0
    %836 = vmatpush1.bf16.msra.mxu0 %v625
    %837 = vmatprep.subr.bf16.mxu0 0
    %838 = vmatpush1.bf16.msra.mxu0 %v626
    %839 = vmatprep.subr.bf16.mxu0 0
    %840 = vmatpush1.bf16.msra.mxu0 %v627
    %841 = vmatprep.subr.bf16.mxu0 0
    %842 = vmatpush1.bf16.msra.mxu0 %v628
    %843 = vmatprep.subr.bf16.mxu0 0
    %844 = vmatpush1.bf16.msra.mxu0 %v629
    %845 = vmatprep.subr.bf16.mxu0 0
    %846 = vmatpush1.bf16.msra.mxu0 %v630
    %847 = vmatprep.mubr.bf16.mxu0 %v175
    %848 = vmatmul.mubr.bf16.gmra.mrb[0].mxu0 %v174
    %v849 = vpop.f32.mrb[0].mxu0
    %v850 = vadd.f32 %v810, %v849
    %v851 = vpop.f32.mrb[0].mxu0
    %v852 = vpop.f32.mrb[0].mxu0
    %v853 = vpop.f32.mrb[0].mxu0
    %854 = vdwg.mxu0
    %v855 = vmax.f32 %v850, 0.0
    %v856 = vpack.c.bf16 %v855, %v855
    %v857 = vld [vmem:[#allocation8] sm:$0xf]
    %v858 = vld [vmem:[#allocation8 + $0x4] sm:$0xf]
    %v859 = vld [vmem:[#allocation8 + $0x8] sm:$0xf]
    %v860 = vld [vmem:[#allocation8 + $0xc] sm:$0xf]
    %v861 = vld [vmem:[#allocation8 + $0x10] sm:$0xf]
    %v862 = vld [vmem:[#allocation8 + $0x14] sm:$0xf]
    %v863 = vld [vmem:[#allocation8 + $0x18] sm:$0xf]
    %v864 = vld [vmem:[#allocation8 + $0x1c] sm:$0xf]
    %v865 = vld [vmem:[#allocation8 + $0x20] sm:$0xf]
    %v866 = vld [vmem:[#allocation8 + $0x24] sm:$0xf]
    %v867 = vld [vmem:[#allocation8 + $0x28] sm:$0xf]
    %v868 = vld [vmem:[#allocation8 + $0x2c] sm:$0xf]
    %v869 = vld [vmem:[#allocation8 + $0x30] sm:$0xf]
    %v870 = vld [vmem:[#allocation8 + $0x34] sm:$0xf]
    %v871 = vld [vmem:[#allocation8 + $0x38] sm:$0xf]
    %v872 = vld [vmem:[#allocation8 + $0x3c] sm:$0xf]
    %v873 = vld [vmem:[%s5] sm:$0x1]
    %v875 = vlaneseq
    %v876 = vshrl.u32 %v875, 7
    %v877 = vsub.s32 0, %v876
    %v878 = vrot.slane %v873, %v877
    %v896 = vunpack.c.l.b16 %v857
    %v897 = vunpack.c.l.b16 %v858
    %v898 = vunpack.c.l.b16 %v859
    %v899 = vunpack.c.l.b16 %v860
    %v900 = vunpack.c.l.b16 %v861
    %v901 = vunpack.c.l.b16 %v862
    %v902 = vunpack.c.l.b16 %v863
    %v903 = vunpack.c.l.b16 %v864
    %v904 = vunpack.c.l.b16 %v865
    %v905 = vunpack.c.l.b16 %v866
    %v906 = vunpack.c.l.b16 %v867
    %v907 = vunpack.c.l.b16 %v868
    %v908 = vunpack.c.l.b16 %v869
    %v909 = vunpack.c.l.b16 %v870
    %v910 = vunpack.c.l.b16 %v871
    %v911 = vunpack.c.l.b16 %v872
    %v912 = vpack.c.b16 %v897, %v896
    %v913 = vpack.c.b16 %v899, %v898
    %v914 = vpack.c.b16 %v901, %v900
    %v915 = vpack.c.b16 %v903, %v902
    %v916 = vpack.c.b16 %v905, %v904
    %v917 = vpack.c.b16 %v907, %v906
    %v918 = vpack.c.b16 %v909, %v908
    %v919 = vpack.c.b16 %v911, %v910
    %928 = vmatprep.subr.bf16.mxu0 0
    %929 = vmatpush1.bf16.msra.mxu0 %v912
    %930 = vmatprep.subr.bf16.mxu0 0
    %931 = vmatpush1.bf16.msra.mxu0 %v913
    %932 = vmatprep.subr.bf16.mxu0 0
    %933 = vmatpush1.bf16.msra.mxu0 %v914
    %934 = vmatprep.subr.bf16.mxu0 0
    %935 = vmatpush1.bf16.msra.mxu0 %v915
    %936 = vmatprep.subr.bf16.mxu0 0
    %937 = vmatpush1.bf16.msra.mxu0 %v916
    %938 = vmatprep.subr.bf16.mxu0 0
    %939 = vmatpush1.bf16.msra.mxu0 %v917
    %940 = vmatprep.subr.bf16.mxu0 0
    %941 = vmatpush1.bf16.msra.mxu0 %v918
    %942 = vmatprep.subr.bf16.mxu0 0
    %943 = vmatpush1.bf16.msra.mxu0 %v919
    %944 = vmatprep.subr.bf16.mxu0 0
    %945 = vmatpush1.bf16.msra.mxu0 0
    %946 = vmatprep.subr.bf16.mxu0 0
    %947 = vmatpush1.bf16.msra.mxu0 0
    %948 = vmatprep.subr.bf16.mxu0 0
    %949 = vmatpush1.bf16.msra.mxu0 0
    %950 = vmatprep.subr.bf16.mxu0 0
    %951 = vmatpush1.bf16.msra.mxu0 0
    %952 = vmatprep.subr.bf16.mxu0 0
    %953 = vmatpush1.bf16.msra.mxu0 0
    %954 = vmatprep.subr.bf16.mxu0 0
    %955 = vmatpush1.bf16.msra.mxu0 0
    %956 = vmatprep.subr.bf16.mxu0 0
    %957 = vmatpush1.bf16.msra.mxu0 0
    %958 = vmatprep.subr.bf16.mxu0 0
    %959 = vmatpush1.bf16.msra.mxu0 0
    %960 = vmatprep.mubr.bf16.mxu0 0
    %961 = vmatmul.mubr.bf16.gmra.mrb[0].mxu0 %v856
    %v962 = vpop.f32.mrb[0].mxu0
    %v963 = vadd.f32 %v878, %v962
    %v964 = vpop.f32.mrb[0].mxu0
    %v965 = vpop.f32.mrb[0].mxu0
    %v966 = vpop.f32.mrb[0].mxu0
    %967 = vdwg.mxu0
    %968 = vst [vmem:[#allocation10] sm:$0x3] %v963
    // Predicated region
    $region42: #{tpu_custom_call.1} parent=1 // pred_check
      _
    $region43: #{tpu_custom_call.1} parent=1 // pred_check_branch
      %970 = sbr.rel (0) target = $region45
    $region44: #{tpu_custom_call.1} parent=1 // pred_region
      %s972 = ssub.s32 32, 32
      %973 = vsyncadd [#allocation4], %s972
      %s975 = sshll.u32 [#allocation10], 4
      %s976 = int_to_ptr.vmem [resolvable:$true] %s975
      %978 = dma.vmem_to_hbm [thread:$0]  %s976, 32, %s6, [#allocation4]
    $region45: #{tpu_custom_call.1} parent=1 // pred_fallthru
      _
    // Predicated region
    $region46: #{tpu_custom_call.1} parent=1 // pred_check
      _
    $region47: #{tpu_custom_call.1} parent=1 // pred_check_branch
      %980 = sbr.rel (0) target = $region49
    $region48: #{tpu_custom_call.1} parent=1 // pred_region
      %981 = dma.done [#allocation4], 32
    $region49: #{tpu_custom_call.1} parent=1 // pred_fallthru
      _
    %982 = vsyncpa [#allocation3], 1
    %983 = vsyncpa [#allocation6], 1
    %984 = vsyncpa [#allocation9], 1
    %985 = vsyncpa [#allocation4], 1

</llo_original>
